<compile_context>
chip_gen: v6e
topology: v6e:2x2x1
jax: 0.10.0
libtpu: 0.0.40
codegen_flags: <defaults>
</compile_context>

<pallas_src>
import jax
import jax.numpy as jnp
import numpy as np
from jax.experimental import pallas as pl
from jax.experimental.pallas import tpu as pltpu


def _vmem_physical_bytes():
    """Per-TensorCore physical VMEM (v5e/v6e: 128 MiB, v7x: 64 MiB)."""
    try:
        info = pltpu.get_tpu_info()
        cap = int(getattr(info, "vmem_capacity_bytes", 0))
        if cap > 0:
            return cap
    except Exception:
        pass
    return 64 << 20  # conservative default: safe on every generation


def _choose_fold_factor(H, W):
    """Fold k H-rows into the lane axis: (H, W) -> (H//k, k*W), free reshape.

    Makes the minor dim lane-dense when W is small instead of zero-padding W
    (which would inflate both HBM streams by up to 128/W).
    """
    if W >= 128 or H == 1:
        return 1
    divisors = [k for k in range(1, H + 1) if H % k == 0]
    for k in divisors:                 # exact multiple of 128: best fill
        if (k * W) % 128 == 0:
            return k
    for k in divisors:                 # otherwise: at least one full lane tile
        if k * W >= 128:
            return k
    return H                           # H*W < 128: fold everything


def _choose_tiling(B, C, Hf, Wf, itemsize, block_cap):
    """Pick (BB, TH, Hp): batch block, folded-H tile, padded folded-H."""
    lane = -(-Wf // 128) * 128                 # VMEM lane padding
    row_bytes = C * lane * itemsize            # one folded-H row, one batch elem
    full_bytes = -(-Hf // 8) * 8 * row_bytes
    if full_bytes <= block_cap:
        # Whole folded-H extent per step.  Keep >= 2 batch blocks whenever
        # B >= 2 so the v7x second TensorCore gets half of the parallel axis.
        bb = max(1, min(B if B < 2 else B // 2, block_cap // full_bytes))
        while B % bb:
            bb -= 1
        return bb, Hf, Hf
    rows_cap = max(1, block_cap // row_bytes)
    # Prefer an exact multiple-of-8 divisor of Hf (no padding copy) ...
    th_div = 0
    for th in range(min(rows_cap, Hf) // 8 * 8, 7, -8):
        if Hf % th == 0:
            th_div = th
            break
    th_pad = max(8, rows_cap // 8 * 8)
    if th_div >= th_pad // 2:
        return 1, th_div, Hf
    # ... otherwise zero-pad Hf so the tile is sized purely for bandwidth.
    th = min(th_pad, -(-Hf // 8) * 8)
    return 1, th, -(-Hf // th) * th


def _paf_partials_kernel(pred_ref, tgt_ref, mse_sum_ref, msen_sum_ref, nz_ref):
    """Accumulate per-(b, c, w) partials over the folded-H grid axis."""
    C = pred_ref.shape[1]

    @pl.when(pl.program_id(1) == 0)
    def _init():
        mse_sum_ref[...] = jnp.zeros_like(mse_sum_ref)
        msen_sum_ref[...] = jnp.zeros_like(msen_sum_ref)
        nz_ref[...] = jnp.zeros_like(nz_ref)

    def accum(c, p, p_sw, t):
        # Switched prediction for channel c is -pred[C-1-c], so
        # (switched - t)^2 == (p_sw + t)^2.
        d_n = p - t
        mse_n = d_n * d_n
        d_s = p_sw + t
        mse = jnp.minimum(mse_n, d_s * d_s)
        sl = slice(c, c + 1)
        mse_sum_ref[:, sl, :] += jnp.sum(mse, axis=2)            # (BB, 1, W)
        msen_sum_ref[:, sl, :] += jnp.sum(mse_n, axis=2)         # (BB, 1, W)
        nz_ref[:, sl, :] = jnp.maximum(nz_ref[:, sl, :],
                                       jnp.max(jnp.abs(t), axis=2))

    # Static per-channel-pair loop: channels c and C-1-c need exactly the same
    # four (BB, 1, TH, W) planes, so each plane is read once per pair and the
    # live f32 working set stays at a handful of planes (not ~8 full blocks).
    for c in range((C + 1) // 2):
        cr = C - 1 - c
        p_c = pred_ref[:, c:c + 1, :, :].astype(jnp.float32)
        t_c = tgt_ref[:, c:c + 1, :, :].astype(jnp.float32)
        if cr == c:
            accum(c, p_c, p_c, t_c)
        else:
            p_r = pred_ref[:, cr:cr + 1, :, :].astype(jnp.float32)
            t_r = tgt_ref[:, cr:cr + 1, :, :].astype(jnp.float32)
            accum(c, p_c, p_r, t_c)
            accum(cr, p_r, p_c, t_r)


@jax.jit
def symetric_paf_loss(predictions, targets):
    """Pallas implementation of SymetricPAFLoss.forward (returns a scalar)."""
    B, C, H, W = predictions.shape
    itemsize = jnp.dtype(predictions.dtype).itemsize

    # ---- generation-aware VMEM budget --------------------------------------
    phys = _vmem_physical_bytes()
    vmem_ceiling = (phys * 13) // 16          # ~81%: ~52 MiB v7x, ~104 MiB v5e/v6e
    n_pairs = (C + 1) // 2
    temp_planes = 8 * min(n_pairs, 2)         # conservative co-live f32 temporaries
    denom = 4.0 + temp_planes * 4.0 / (C * itemsize)
    block_cap = int((vmem_ceiling - (6 << 20)) / denom)
    block_cap = max(1 << 20, min(block_cap, 8 << 20))

    # ---- lane-density fold + tiling -----------------------------------------
    k = _choose_fold_factor(H, W)
    Hf, Wf = H // k, k * W
    p_in = predictions.reshape(B, C, Hf, Wf) if k > 1 else predictions
    t_in = targets.reshape(B, C, Hf, Wf) if k > 1 else targets

    BB, TH, Hp = _choose_tiling(B, C, Hf, Wf, itemsize, block_cap)
    if Hp != Hf:
        pad = ((0, 0), (0, 0), (0, Hp - Hf), (0, 0))
        p_in = jnp.pad(p_in, pad)
        t_in = jnp.pad(t_in, pad)

    # TODO(synk): for B == 1 with very wide W, add a third ("parallel") W-tile
    # grid axis so the v7x second TensorCore also gets work for batch-1 shapes.
    grid = (B // BB, Hp // TH)

    # Scoped VMEM actually needed: 2 double-buffered input blocks + f32
    # temporaries + resident output accumulators + margin; capped per chip.
    lane = -(-Wf // 128) * 128
    subl = -(-TH // 8) * 8
    blk_bytes = BB * C * subl * lane * itemsize
    plane_f32 = BB * subl * lane * 4
    out_bytes = 3 * 2 * BB * (-(-C // 8) * 8) * lane * 4
    need = 4 * blk_bytes + temp_planes * plane_f32 + out_bytes + (4 << 20)
    vmem_limit = int(min(max(need, 32 << 20), vmem_ceiling))

    in_spec = pl.BlockSpec((BB, C, TH, Wf), lambda b, h: (b, 0, h, 0))
    out_spec = pl.BlockSpec((BB, C, Wf), lambda b, h: (b, 0, 0))
    out_shape = tuple(jax.ShapeDtypeStruct((B, C, Wf), jnp.float32)
                      for _ in range(3))

    mse_sum, msen_sum, nz = pl.pallas_call(
        _paf_partials_kernel,
        out_shape=out_shape,
        grid_spec=pltpu.PrefetchScalarGridSpec(
            num_scalar_prefetch=0,
            grid=grid,
            in_specs=[in_spec, in_spec],
            out_specs=[out_spec, out_spec, out_spec],
        ),
        compiler_params=pltpu.CompilerParams(
            dimension_semantics=("parallel", "arbitrary"),
            vmem_limit_bytes=vmem_limit),
    )(p_in, t_in)

    # ---- tiny fused XLA epilogue --------------------------------------------
    if k > 1:  # un-fold the lane axis back to (k, W) and finish the H reduce
        mse_sum = jnp.sum(mse_sum.reshape(B, C, k, W), axis=2)
        msen_sum = jnp.sum(msen_sum.reshape(B, C, k, W), axis=2)
        nz = jnp.max(nz.reshape(B, C, k, W), axis=2)
    ss = (nz > 0.0).astype(jnp.float32)            # (B, C, W): any(t != 0) over H
    bg = 1.0 - jnp.max(ss, axis=1)                 # (B, W): all-zero over C and H
    seg_sum = jnp.sum(ss * mse_sum)
    seg_cnt = jnp.sum(ss) * float(H)
    bg_sum = jnp.sum(bg * jnp.sum(msen_sum, axis=1))
    bg_cnt = jnp.sum(bg) * float(C * H)
    return seg_sum / seg_cnt + bg_sum / bg_cnt


def symetric_paf_loss_ref(predictions, targets):
    """Pure-JAX reference mirroring the PyTorch module exactly."""
    t_mask = targets != 0.0
    ss = jnp.any(t_mask, axis=2)                                     # (B, C, W)
    mask_segs = jnp.broadcast_to(ss[:, :, None, :], targets.shape)
    mask_bgnd = jnp.broadcast_to(
        (~jnp.any(ss, axis=1))[:, None, None, :], targets.shape)
    predictions_switched = -jnp.flip(predictions, axis=1)
    mse_normal = (predictions - targets) ** 2
    mse_switched = (predictions_switched - targets) ** 2
    mse = jnp.minimum(mse_normal, mse_switched)
    loss_seg = jnp.sum(jnp.where(mask_segs, mse, 0.0)) / jnp.sum(mask_segs)
    loss_bgnd = jnp.sum(jnp.where(mask_bgnd, mse_normal, 0.0)) / jnp.sum(mask_bgnd)
    return loss_seg + loss_bgnd


if __name__ == "__main__":
    B, C, H, W = 2, 4, 16, 16
    key = jax.random.PRNGKey(0)
    kp, kt = jax.random.split(key)
    predictions = jax.random.normal(kp, (B, C, H, W), dtype=jnp.float32)
    targets = jax.random.normal(kt, (B, C, H, W), dtype=jnp.float32)
    # Make half of the W columns pure background (targets all-zero over C and H)
    # so both the segment and background masks are non-empty, as in real PAF
    # target maps; otherwise PyTorch's mean-over-empty would be NaN.
    targets = targets.at[:, :, :, W // 2:].set(0.0)

    loss = jax.block_until_ready(symetric_paf_loss(predictions, targets))
    ref = jax.block_until_ready(symetric_paf_loss_ref(predictions, targets))
    np.testing.assert_allclose(np.asarray(loss), np.asarray(ref),
                               rtol=1e-5, atol=1e-6)
    print("KERNEL_OK")
</pallas_src>

<mosaic_0001>
module attributes {stable_mosaic.version = 11 : i64} {
  func.func @_paf_partials_kernel(%arg0: i32, %arg1: i32, %arg2: memref<1x4x2x128xf32, #tpu.memory_space<vmem>>, %arg3: memref<1x4x2x128xf32, #tpu.memory_space<vmem>>, %arg4: memref<1x4x128xf32, #tpu.memory_space<vmem>>, %arg5: memref<1x4x128xf32, #tpu.memory_space<vmem>>, %arg6: memref<1x4x128xf32, #tpu.memory_space<vmem>>) attributes {dimension_semantics = [#tpu.dimension_semantics<parallel>, #tpu.dimension_semantics<arbitrary>], iteration_bounds = array<i64: 2, 1>, scalar_prefetch = 0 : i64, scratch_operands = 0 : i64, tpu.core_type = #tpu.core_type<tc>, window_params = [{transform_indices = @transform_0, window_bounds = array<i64: 1, 4, 2, 128>}, {transform_indices = @transform_1, window_bounds = array<i64: 1, 4, 2, 128>}, {transform_indices = @transform_2, window_bounds = array<i64: 1, 4, 128>}, {transform_indices = @transform_3, window_bounds = array<i64: 1, 4, 128>}, {transform_indices = @transform_4, window_bounds = array<i64: 1, 4, 128>}]} {
    %c0_i32 = arith.constant 0 : i32
    %0 = arith.cmpi eq, %arg1, %c0_i32 : i32
    %1 = arith.extui %0 : i1 to i32
    %c0_i32_0 = arith.constant 0 : i32
    %2 = arith.cmpi ne, %1, %c0_i32_0 : i32
    scf.if %2 {
      %cst_112 = arith.constant 0.000000e+00 : f32
      %83 = vector.broadcast %cst_112 : f32 to vector<1x4x128xf32>
      %c0_113 = arith.constant 0 : index
      %c0_114 = arith.constant 0 : index
      %c0_115 = arith.constant 0 : index
      %84 = vector.load %arg4[%c0_113, %c0_114, %c0_115] : memref<1x4x128xf32, #tpu.memory_space<vmem>>, vector<1x4x128xf32>
      tpu.vector_store %arg4[%c0_113, %c0_114, %c0_115], %83 {strides = array<i32>} : memref<1x4x128xf32, #tpu.memory_space<vmem>>, vector<1x4x128xf32>,
      %cst_116 = arith.constant 0.000000e+00 : f32
      %85 = vector.broadcast %cst_116 : f32 to vector<1x4x128xf32>
      %c0_117 = arith.constant 0 : index
      %c0_118 = arith.constant 0 : index
      %c0_119 = arith.constant 0 : index
      %86 = vector.load %arg5[%c0_117, %c0_118, %c0_119] : memref<1x4x128xf32, #tpu.memory_space<vmem>>, vector<1x4x128xf32>
      tpu.vector_store %arg5[%c0_117, %c0_118, %c0_119], %85 {strides = array<i32>} : memref<1x4x128xf32, #tpu.memory_space<vmem>>, vector<1x4x128xf32>,
      %cst_120 = arith.constant 0.000000e+00 : f32
      %87 = vector.broadcast %cst_120 : f32 to vector<1x4x128xf32>
      %c0_121 = arith.constant 0 : index
      %c0_122 = arith.constant 0 : index
      %c0_123 = arith.constant 0 : index
      %88 = vector.load %arg6[%c0_121, %c0_122, %c0_123] : memref<1x4x128xf32, #tpu.memory_space<vmem>>, vector<1x4x128xf32>
      tpu.vector_store %arg6[%c0_121, %c0_122, %c0_123], %87 {strides = array<i32>} : memref<1x4x128xf32, #tpu.memory_space<vmem>>, vector<1x4x128xf32>,
    } else {
    }
    %c0 = arith.constant 0 : index
    %c0_1 = arith.constant 0 : index
    %c0_2 = arith.constant 0 : index
    %c0_3 = arith.constant 0 : index
    %3 = vector.load %arg2[%c0, %c0_1, %c0_2, %c0_3] : memref<1x4x2x128xf32, #tpu.memory_space<vmem>>, vector<1x1x2x128xf32>
    %c0_4 = arith.constant 0 : index
    %c0_5 = arith.constant 0 : index
    %c0_6 = arith.constant 0 : index
    %c0_7 = arith.constant 0 : index
    %4 = vector.load %arg3[%c0_4, %c0_5, %c0_6, %c0_7] : memref<1x4x2x128xf32, #tpu.memory_space<vmem>>, vector<1x1x2x128xf32>
    %c0_8 = arith.constant 0 : index
    %c3 = arith.constant 3 : index
    %c0_9 = arith.constant 0 : index
    %c0_10 = arith.constant 0 : index
    %5 = vector.load %arg2[%c0_8, %c3, %c0_9, %c0_10] : memref<1x4x2x128xf32, #tpu.memory_space<vmem>>, vector<1x1x2x128xf32>
    %c0_11 = arith.constant 0 : index
    %c3_12 = arith.constant 3 : index
    %c0_13 = arith.constant 0 : index
    %c0_14 = arith.constant 0 : index
    %6 = vector.load %arg3[%c0_11, %c3_12, %c0_13, %c0_14] : memref<1x4x2x128xf32, #tpu.memory_space<vmem>>, vector<1x1x2x128xf32>
    %7 = arith.subf %3, %4 : vector<1x1x2x128xf32>
    %8 = arith.mulf %7, %7 : vector<1x1x2x128xf32>
    %9 = arith.addf %5, %4 : vector<1x1x2x128xf32>
    %10 = arith.mulf %9, %9 : vector<1x1x2x128xf32>
    %11 = arith.minimumf %8, %10 : vector<1x1x2x128xf32>
    %c0_15 = arith.constant 0 : index
    %c0_16 = arith.constant 0 : index
    %c0_17 = arith.constant 0 : index
    %12 = vector.load %arg4[%c0_15, %c0_16, %c0_17] : memref<1x4x128xf32, #tpu.memory_space<vmem>>, vector<1x1x128xf32>
    %cst = arith.constant dense<0.000000e+00> : vector<1x1x128xf32>
    %13 = vector.multi_reduction <add>, %11, %cst [2] : vector<1x1x2x128xf32> to vector<1x1x128xf32>
    %14 = arith.addf %12, %13 : vector<1x1x128xf32>
    %c0_18 = arith.constant 0 : index
    %c0_19 = arith.constant 0 : index
    %c0_20 = arith.constant 0 : index
    %15 = vector.load %arg4[%c0_18, %c0_19, %c0_20] : memref<1x4x128xf32, #tpu.memory_space<vmem>>, vector<1x1x128xf32>
    tpu.vector_store %arg4[%c0_18, %c0_19, %c0_20], %14 {strides = array<i32>} : memref<1x4x128xf32, #tpu.memory_space<vmem>>, vector<1x1x128xf32>,
    %c0_21 = arith.constant 0 : index
    %c0_22 = arith.constant 0 : index
    %c0_23 = arith.constant 0 : index
    %16 = vector.load %arg5[%c0_21, %c0_22, %c0_23] : memref<1x4x128xf32, #tpu.memory_space<vmem>>, vector<1x1x128xf32>
    %cst_24 = arith.constant dense<0.000000e+00> : vector<1x1x128xf32>
    %17 = vector.multi_reduction <add>, %8, %cst_24 [2] : vector<1x1x2x128xf32> to vector<1x1x128xf32>
    %18 = arith.addf %16, %17 : vector<1x1x128xf32>
    %c0_25 = arith.constant 0 : index
    %c0_26 = arith.constant 0 : index
    %c0_27 = arith.constant 0 : index
    %19 = vector.load %arg5[%c0_25, %c0_26, %c0_27] : memref<1x4x128xf32, #tpu.memory_space<vmem>>, vector<1x1x128xf32>
    tpu.vector_store %arg5[%c0_25, %c0_26, %c0_27], %18 {strides = array<i32>} : memref<1x4x128xf32, #tpu.memory_space<vmem>>, vector<1x1x128xf32>,
    %c0_28 = arith.constant 0 : index
    %c0_29 = arith.constant 0 : index
    %c0_30 = arith.constant 0 : index
    %20 = vector.load %arg6[%c0_28, %c0_29, %c0_30] : memref<1x4x128xf32, #tpu.memory_space<vmem>>, vector<1x1x128xf32>
    %21 = math.absf %4 : vector<1x1x2x128xf32>
    %cst_31 = arith.constant dense<0xFF800000> : vector<1x1x128xf32>
    %22 = vector.multi_reduction <maximumf>, %21, %cst_31 [2] : vector<1x1x2x128xf32> to vector<1x1x128xf32>
    %23 = arith.maximumf %20, %22 : vector<1x1x128xf32>
    %c0_32 = arith.constant 0 : index
    %c0_33 = arith.constant 0 : index
    %c0_34 = arith.constant 0 : index
    %24 = vector.load %arg6[%c0_32, %c0_33, %c0_34] : memref<1x4x128xf32, #tpu.memory_space<vmem>>, vector<1x1x128xf32>
    tpu.vector_store %arg6[%c0_32, %c0_33, %c0_34], %23 {strides = array<i32>} : memref<1x4x128xf32, #tpu.memory_space<vmem>>, vector<1x1x128xf32>,
    %25 = arith.subf %5, %6 : vector<1x1x2x128xf32>
    %26 = arith.mulf %25, %25 : vector<1x1x2x128xf32>
    %27 = arith.addf %3, %6 : vector<1x1x2x128xf32>
    %28 = arith.mulf %27, %27 : vector<1x1x2x128xf32>
    %29 = arith.minimumf %26, %28 : vector<1x1x2x128xf32>
    %c0_35 = arith.constant 0 : index
    %c3_36 = arith.constant 3 : index
    %c0_37 = arith.constant 0 : index
    %30 = vector.load %arg4[%c0_35, %c3_36, %c0_37] : memref<1x4x128xf32, #tpu.memory_space<vmem>>, vector<1x1x128xf32>
    %cst_38 = arith.constant dense<0.000000e+00> : vector<1x1x128xf32>
    %31 = vector.multi_reduction <add>, %29, %cst_38 [2] : vector<1x1x2x128xf32> to vector<1x1x128xf32>
    %32 = arith.addf %30, %31 : vector<1x1x128xf32>
    %c0_39 = arith.constant 0 : index
    %c3_40 = arith.constant 3 : index
    %c0_41 = arith.constant 0 : index
    %33 = vector.load %arg4[%c0_39, %c3_40, %c0_41] : memref<1x4x128xf32, #tpu.memory_space<vmem>>, vector<1x1x128xf32>
    tpu.vector_store %arg4[%c0_39, %c3_40, %c0_41], %32 {strides = array<i32>} : memref<1x4x128xf32, #tpu.memory_space<vmem>>, vector<1x1x128xf32>,
    %c0_42 = arith.constant 0 : index
    %c3_43 = arith.constant 3 : index
    %c0_44 = arith.constant 0 : index
    %34 = vector.load %arg5[%c0_42, %c3_43, %c0_44] : memref<1x4x128xf32, #tpu.memory_space<vmem>>, vector<1x1x128xf32>
    %cst_45 = arith.constant dense<0.000000e+00> : vector<1x1x128xf32>
    %35 = vector.multi_reduction <add>, %26, %cst_45 [2] : vector<1x1x2x128xf32> to vector<1x1x128xf32>
    %36 = arith.addf %34, %35 : vector<1x1x128xf32>
    %c0_46 = arith.constant 0 : index
    %c3_47 = arith.constant 3 : index
    %c0_48 = arith.constant 0 : index
    %37 = vector.load %arg5[%c0_46, %c3_47, %c0_48] : memref<1x4x128xf32, #tpu.memory_space<vmem>>, vector<1x1x128xf32>
    tpu.vector_store %arg5[%c0_46, %c3_47, %c0_48], %36 {strides = array<i32>} : memref<1x4x128xf32, #tpu.memory_space<vmem>>, vector<1x1x128xf32>,
    %c0_49 = arith.constant 0 : index
    %c3_50 = arith.constant 3 : index
    %c0_51 = arith.constant 0 : index
    %38 = vector.load %arg6[%c0_49, %c3_50, %c0_51] : memref<1x4x128xf32, #tpu.memory_space<vmem>>, vector<1x1x128xf32>
    %39 = math.absf %6 : vector<1x1x2x128xf32>
    %cst_52 = arith.constant dense<0xFF800000> : vector<1x1x128xf32>
    %40 = vector.multi_reduction <maximumf>, %39, %cst_52 [2] : vector<1x1x2x128xf32> to vector<1x1x128xf32>
    %41 = arith.maximumf %38, %40 : vector<1x1x128xf32>
    %c0_53 = arith.constant 0 : index
    %c3_54 = arith.constant 3 : index
    %c0_55 = arith.constant 0 : index
    %42 = vector.load %arg6[%c0_53, %c3_54, %c0_55] : memref<1x4x128xf32, #tpu.memory_space<vmem>>, vector<1x1x128xf32>
    tpu.vector_store %arg6[%c0_53, %c3_54, %c0_55], %41 {strides = array<i32>} : memref<1x4x128xf32, #tpu.memory_space<vmem>>, vector<1x1x128xf32>,
    %c0_56 = arith.constant 0 : index
    %c1 = arith.constant 1 : index
    %c0_57 = arith.constant 0 : index
    %c0_58 = arith.constant 0 : index
    %43 = vector.load %arg2[%c0_56, %c1, %c0_57, %c0_58] : memref<1x4x2x128xf32, #tpu.memory_space<vmem>>, vector<1x1x2x128xf32>
    %c0_59 = arith.constant 0 : index
    %c1_60 = arith.constant 1 : index
    %c0_61 = arith.constant 0 : index
    %c0_62 = arith.constant 0 : index
    %44 = vector.load %arg3[%c0_59, %c1_60, %c0_61, %c0_62] : memref<1x4x2x128xf32, #tpu.memory_space<vmem>>, vector<1x1x2x128xf32>
    %c0_63 = arith.constant 0 : index
    %c2 = arith.constant 2 : index
    %c0_64 = arith.constant 0 : index
    %c0_65 = arith.constant 0 : index
    %45 = vector.load %arg2[%c0_63, %c2, %c0_64, %c0_65] : memref<1x4x2x128xf32, #tpu.memory_space<vmem>>, vector<1x1x2x128xf32>
    %c0_66 = arith.constant 0 : index
    %c2_67 = arith.constant 2 : index
    %c0_68 = arith.constant 0 : index
    %c0_69 = arith.constant 0 : index
    %46 = vector.load %arg3[%c0_66, %c2_67, %c0_68, %c0_69] : memref<1x4x2x128xf32, #tpu.memory_space<vmem>>, vector<1x1x2x128xf32>
    %47 = arith.subf %43, %44 : vector<1x1x2x128xf32>
    %48 = arith.mulf %47, %47 : vector<1x1x2x128xf32>
    %49 = arith.addf %45, %44 : vector<1x1x2x128xf32>
    %50 = arith.mulf %49, %49 : vector<1x1x2x128xf32>
    %51 = arith.minimumf %48, %50 : vector<1x1x2x128xf32>
    %c0_70 = arith.constant 0 : index
    %c1_71 = arith.constant 1 : index
    %c0_72 = arith.constant 0 : index
    %52 = vector.load %arg4[%c0_70, %c1_71, %c0_72] : memref<1x4x128xf32, #tpu.memory_space<vmem>>, vector<1x1x128xf32>
    %cst_73 = arith.constant dense<0.000000e+00> : vector<1x1x128xf32>
    %53 = vector.multi_reduction <add>, %51, %cst_73 [2] : vector<1x1x2x128xf32> to vector<1x1x128xf32>
    %54 = arith.addf %52, %53 : vector<1x1x128xf32>
    %c0_74 = arith.constant 0 : index
    %c1_75 = arith.constant 1 : index
    %c0_76 = arith.constant 0 : index
    %55 = vector.load %arg4[%c0_74, %c1_75, %c0_76] : memref<1x4x128xf32, #tpu.memory_space<vmem>>, vector<1x1x128xf32>
    tpu.vector_store %arg4[%c0_74, %c1_75, %c0_76], %54 {strides = array<i32>} : memref<1x4x128xf32, #tpu.memory_space<vmem>>, vector<1x1x128xf32>,
    %c0_77 = arith.constant 0 : index
    %c1_78 = arith.constant 1 : index
    %c0_79 = arith.constant 0 : index
    %56 = vector.load %arg5[%c0_77, %c1_78, %c0_79] : memref<1x4x128xf32, #tpu.memory_space<vmem>>, vector<1x1x128xf32>
    %cst_80 = arith.constant dense<0.000000e+00> : vector<1x1x128xf32>
    %57 = vector.multi_reduction <add>, %48, %cst_80 [2] : vector<1x1x2x128xf32> to vector<1x1x128xf32>
    %58 = arith.addf %56, %57 : vector<1x1x128xf32>
    %c0_81 = arith.constant 0 : index
    %c1_82 = arith.constant 1 : index
    %c0_83 = arith.constant 0 : index
    %59 = vector.load %arg5[%c0_81, %c1_82, %c0_83] : memref<1x4x128xf32, #tpu.memory_space<vmem>>, vector<1x1x128xf32>
    tpu.vector_store %arg5[%c0_81, %c1_82, %c0_83], %58 {strides = array<i32>} : memref<1x4x128xf32, #tpu.memory_space<vmem>>, vector<1x1x128xf32>,
    %c0_84 = arith.constant 0 : index
    %c1_85 = arith.constant 1 : index
    %c0_86 = arith.constant 0 : index
    %60 = vector.load %arg6[%c0_84, %c1_85, %c0_86] : memref<1x4x128xf32, #tpu.memory_space<vmem>>, vector<1x1x128xf32>
    %61 = math.absf %44 : vector<1x1x2x128xf32>
    %cst_87 = arith.constant dense<0xFF800000> : vector<1x1x128xf32>
    %62 = vector.multi_reduction <maximumf>, %61, %cst_87 [2] : vector<1x1x2x128xf32> to vector<1x1x128xf32>
    %63 = arith.maximumf %60, %62 : vector<1x1x128xf32>
    %c0_88 = arith.constant 0 : index
    %c1_89 = arith.constant 1 : index
    %c0_90 = arith.constant 0 : index
    %64 = vector.load %arg6[%c0_88, %c1_89, %c0_90] : memref<1x4x128xf32, #tpu.memory_space<vmem>>, vector<1x1x128xf32>
    tpu.vector_store %arg6[%c0_88, %c1_89, %c0_90], %63 {strides = array<i32>} : memref<1x4x128xf32, #tpu.memory_space<vmem>>, vector<1x1x128xf32>,
    %65 = arith.subf %45, %46 : vector<1x1x2x128xf32>
    %66 = arith.mulf %65, %65 : vector<1x1x2x128xf32>
    %67 = arith.addf %43, %46 : vector<1x1x2x128xf32>
    %68 = arith.mulf %67, %67 : vector<1x1x2x128xf32>
    %69 = arith.minimumf %66, %68 : vector<1x1x2x128xf32>
    %c0_91 = arith.constant 0 : index
    %c2_92 = arith.constant 2 : index
    %c0_93 = arith.constant 0 : index
    %70 = vector.load %arg4[%c0_91, %c2_92, %c0_93] : memref<1x4x128xf32, #tpu.memory_space<vmem>>, vector<1x1x128xf32>
    %cst_94 = arith.constant dense<0.000000e+00> : vector<1x1x128xf32>
    %71 = vector.multi_reduction <add>, %69, %cst_94 [2] : vector<1x1x2x128xf32> to vector<1x1x128xf32>
    %72 = arith.addf %70, %71 : vector<1x1x128xf32>
    %c0_95 = arith.constant 0 : index
    %c2_96 = arith.constant 2 : index
    %c0_97 = arith.constant 0 : index
    %73 = vector.load %arg4[%c0_95, %c2_96, %c0_97] : memref<1x4x128xf32, #tpu.memory_space<vmem>>, vector<1x1x128xf32>
    tpu.vector_store %arg4[%c0_95, %c2_96, %c0_97], %72 {strides = array<i32>} : memref<1x4x128xf32, #tpu.memory_space<vmem>>, vector<1x1x128xf32>,
    %c0_98 = arith.constant 0 : index
    %c2_99 = arith.constant 2 : index
    %c0_100 = arith.constant 0 : index
    %74 = vector.load %arg5[%c0_98, %c2_99, %c0_100] : memref<1x4x128xf32, #tpu.memory_space<vmem>>, vector<1x1x128xf32>
    %cst_101 = arith.constant dense<0.000000e+00> : vector<1x1x128xf32>
    %75 = vector.multi_reduction <add>, %66, %cst_101 [2] : vector<1x1x2x128xf32> to vector<1x1x128xf32>
    %76 = arith.addf %74, %75 : vector<1x1x128xf32>
    %c0_102 = arith.constant 0 : index
    %c2_103 = arith.constant 2 : index
    %c0_104 = arith.constant 0 : index
    %77 = vector.load %arg5[%c0_102, %c2_103, %c0_104] : memref<1x4x128xf32, #tpu.memory_space<vmem>>, vector<1x1x128xf32>
    tpu.vector_store %arg5[%c0_102, %c2_103, %c0_104], %76 {strides = array<i32>} : memref<1x4x128xf32, #tpu.memory_space<vmem>>, vector<1x1x128xf32>,
    %c0_105 = arith.constant 0 : index
    %c2_106 = arith.constant 2 : index
    %c0_107 = arith.constant 0 : index
    %78 = vector.load %arg6[%c0_105, %c2_106, %c0_107] : memref<1x4x128xf32, #tpu.memory_space<vmem>>, vector<1x1x128xf32>
    %79 = math.absf %46 : vector<1x1x2x128xf32>
    %cst_108 = arith.constant dense<0xFF800000> : vector<1x1x128xf32>
    %80 = vector.multi_reduction <maximumf>, %79, %cst_108 [2] : vector<1x1x2x128xf32> to vector<1x1x128xf32>
    %81 = arith.maximumf %78, %80 : vector<1x1x128xf32>
    %c0_109 = arith.constant 0 : index
    %c2_110 = arith.constant 2 : index
    %c0_111 = arith.constant 0 : index
    %82 = vector.load %arg6[%c0_109, %c2_110, %c0_111] : memref<1x4x128xf32, #tpu.memory_space<vmem>>, vector<1x1x128xf32>
    tpu.vector_store %arg6[%c0_109, %c2_110, %c0_111], %81 {strides = array<i32>} : memref<1x4x128xf32, #tpu.memory_space<vmem>>, vector<1x1x128xf32>,
    return
  }
  func.func @transform_0(%arg0: i32, %arg1: i32) -> (i32, i32, i32, i32) {
    %c0_i32 = arith.constant 0 : i32
    %c0_i32_0 = arith.constant 0 : i32
    %c0_i32_1 = arith.constant 0 : i32
    return %arg0, %c0_i32, %arg1, %c0_i32_0 : i32, i32, i32, i32
  }
  func.func @transform_1(%arg0: i32, %arg1: i32) -> (i32, i32, i32, i32) {
    %c0_i32 = arith.constant 0 : i32
    %c0_i32_0 = arith.constant 0 : i32
    %c0_i32_1 = arith.constant 0 : i32
    return %arg0, %c0_i32, %arg1, %c0_i32_0 : i32, i32, i32, i32
  }
  func.func @transform_2(%arg0: i32, %arg1: i32) -> (i32, i32, i32) {
    %c0_i32 = arith.constant 0 : i32
    %c0_i32_0 = arith.constant 0 : i32
    %c0_i32_1 = arith.constant 0 : i32
    return %arg0, %c0_i32, %c0_i32_0 : i32, i32, i32
  }
  func.func @transform_3(%arg0: i32, %arg1: i32) -> (i32, i32, i32) {
    %c0_i32 = arith.constant 0 : i32
    %c0_i32_0 = arith.constant 0 : i32
    %c0_i32_1 = arith.constant 0 : i32
    return %arg0, %c0_i32, %c0_i32_0 : i32, i32, i32
  }
  func.func @transform_4(%arg0: i32, %arg1: i32) -> (i32, i32, i32) {
    %c0_i32 = arith.constant 0 : i32
    %c0_i32_0 = arith.constant 0 : i32
    %c0_i32_1 = arith.constant 0 : i32
    return %arg0, %c0_i32, %c0_i32_0 : i32, i32, i32
  }
}

</mosaic_0001>

<llo_original>
// kernel: symetric_paf_loss.1
$region0: #{symetric_paf_loss.1}
  #allocation0 [shape = 'u32[]', space=smem, size = 0x4, offset = 0x4, fixed_abs, tag = 'smem constant byte address 0x4 - core index']
  #allocation1 [shape = 'u32[144,128]{1,0:T(1,128)}', space=vmem, size = 0x12000, scoped, tag = 'internal scratch']
  %s0 = inlined_call_operand.vmem [shape: f32[2,4,2,128], index: 0, kind: input, shape index: {}]
  %s1 = inlined_call_operand.vmem [shape: f32[2,4,2,128], index: 1, kind: input, shape index: {}]
  %s2 = inlined_call_operand.vmem [shape: f32[2,4,128], index: 2, kind: output, shape index: {0}]
  %s3 = inlined_call_operand.vmem [shape: f32[2,4,128], index: 3, kind: output, shape index: {1}]
  %s4 = inlined_call_operand.vmem [shape: f32[2,4,128], index: 4, kind: output, shape index: {2}]
  %5 = xla_tuple %s2, %s3, %s4
  %s6 = sld [smem:[#allocation0]]
  $region61: #{symetric_paf_loss.1} parent=0
    _
  %s8 = ssub.s32 1, %s6
  %s9 = scalar_select 0, %s8, %s6
  loop: start=0, step=1, limit=4
  $region2: #{symetric_paf_loss.1} parent=0 // loop_pre_header
    _
  $region3: #{symetric_paf_loss.1} parent=0 // loop_header
    %s11 = sphi 0, %s15
    %p12 = scmp.ge.s32.totalorder %s11, 4
    %s18 = sphi 0, %s30
    %s19 = sphi 0, %s26
    %s20 = sphi 0, %s18
    %s21 = sphi 0, %s19
    %s22 = sphi 0, %s20
    %s23 = sphi 0, %s21
    %s35 = sphi 0, %s37
    %s38 = sphi 0, %s35
    %s39 = sphi 0, %s38
    %s55 = sphi 0, %s39
    %s63 = sphi 0, %s65
    %s66 = sphi 0, %s63
    %s67 = sphi 0, %s66
    %s83 = sphi 0, %s67
    %s89 = sphi 0, %s91
    %s92 = sphi 0, %s89
    %s93 = sphi 0, %s92
    %s109 = sphi 0, %s93
    %s115 = sphi 0, %s117
    %s118 = sphi 0, %s115
    %s119 = sphi 0, %s118
    %s135 = sphi 0, %s119
    %s141 = sphi 0, %s143
    %s144 = sphi 0, %s141
    %s145 = sphi 0, %s144
    %s161 = sphi 0, %s145
  $region4: #{symetric_paf_loss.1} parent=0 // loop_header_branch
    %14 = sbr.rel (%p12) target = $region8
  $region5: #{symetric_paf_loss.1} parent=0 // loop_body
    %s16 = ssub.s32 %s11, 1
    %s17 = ssub.s32 %s11, 2
    %s24 = sadd.s32 1, %s19
    %p25 = scmp.ge.s32.totalorder %s24, 1
    %s26 = scalar_select %p25, 0, %s24
    %s27 = sadd.s32 1, %s18
    %s28 = scalar_select %p25, %s27, %s18
    %p29 = scmp.ge.s32.totalorder %s28, 2
    %s30 = scalar_select %p29, 0, %s28
    %s31 = ssub.s32 %s18, %s30
    %s32 = ssub.s32 %s19, %s26
    %s33 = sor.u32 %s31, %s32
    %p34 = scmp.eq.s32.totalorder %s33, 0
    %s36 = sadd.s32 %s35, 1
    %s37 = scalar_select %p34, %s35, %s36
    %p40 = pneg %p34
    %p41 = scmp.eq.s32.totalorder %s11, 1
    %p42 = por %p40, %p41
    %p43 = scmp.ne.s32.totalorder %s35, %s38
    %p44 = scmp.eq.s32.totalorder %s11, 0
    %p45 = por %p43, %p44
    %p46 = scmp.ne.s32.totalorder %s35, %s38
    %p47 = scmp.eq.s32.totalorder %s16, 1
    %p48 = por %p46, %p47
    %p49 = scmp.ne.s32.totalorder %s38, %s39
    %p50 = scmp.eq.s32.totalorder %s16, 0
    %p51 = por %p49, %p50
    %p52 = scmp.ne.s32.totalorder %s38, %s39
    %p53 = scmp.eq.s32.totalorder %s17, 1
    %p54 = por %p52, %p53
    %p56 = scmp.ne.s32.totalorder %s39, %s55
    %p57 = scmp.eq.s32.totalorder %s17, 0
    %p58 = por %p56, %p57
    %s59 = ssub.s32 %s18, %s30
    %s60 = ssub.s32 %s19, %s26
    %s61 = sor.u32 %s59, %s60
    %p62 = scmp.eq.s32.totalorder %s61, 0
    %s64 = sadd.s32 %s63, 1
    %s65 = scalar_select %p62, %s63, %s64
    %p68 = pneg %p62
    %p69 = scmp.eq.s32.totalorder %s11, 1
    %p70 = por %p68, %p69
    %p71 = scmp.ne.s32.totalorder %s63, %s66
    %p72 = scmp.eq.s32.totalorder %s11, 0
    %p73 = por %p71, %p72
    %p74 = scmp.ne.s32.totalorder %s63, %s66
    %p75 = scmp.eq.s32.totalorder %s16, 1
    %p76 = por %p74, %p75
    %p77 = scmp.ne.s32.totalorder %s66, %s67
    %p78 = scmp.eq.s32.totalorder %s16, 0
    %p79 = por %p77, %p78
    %p80 = scmp.ne.s32.totalorder %s66, %s67
    %p81 = scmp.eq.s32.totalorder %s17, 1
    %p82 = por %p80, %p81
    %p84 = scmp.ne.s32.totalorder %s67, %s83
    %p85 = scmp.eq.s32.totalorder %s17, 0
    %p86 = por %p84, %p85
    %s87 = ssub.s32 %s18, %s30
    %p88 = scmp.eq.s32.totalorder %s87, 0
    %s90 = sadd.s32 %s89, 1
    %s91 = scalar_select %p88, %s89, %s90
    %p94 = pneg %p88
    %p95 = scmp.eq.s32.totalorder %s11, 1
    %p96 = por %p94, %p95
    %p97 = scmp.ne.s32.totalorder %s89, %s92
    %p98 = scmp.eq.s32.totalorder %s11, 0
    %p99 = por %p97, %p98
    %p100 = scmp.ne.s32.totalorder %s89, %s92
    %p101 = scmp.eq.s32.totalorder %s16, 1
    %p102 = por %p100, %p101
    %p103 = scmp.ne.s32.totalorder %s92, %s93
    %p104 = scmp.eq.s32.totalorder %s16, 0
    %p105 = por %p103, %p104
    %p106 = scmp.ne.s32.totalorder %s92, %s93
    %p107 = scmp.eq.s32.totalorder %s17, 1
    %p108 = por %p106, %p107
    %p110 = scmp.ne.s32.totalorder %s93, %s109
    %p111 = scmp.eq.s32.totalorder %s17, 0
    %p112 = por %p110, %p111
    %s113 = ssub.s32 %s18, %s30
    %p114 = scmp.eq.s32.totalorder %s113, 0
    %s116 = sadd.s32 %s115, 1
    %s117 = scalar_select %p114, %s115, %s116
    %p120 = pneg %p114
    %p121 = scmp.eq.s32.totalorder %s11, 1
    %p122 = por %p120, %p121
    %p123 = scmp.ne.s32.totalorder %s115, %s118
    %p124 = scmp.eq.s32.totalorder %s11, 0
    %p125 = por %p123, %p124
    %p126 = scmp.ne.s32.totalorder %s115, %s118
    %p127 = scmp.eq.s32.totalorder %s16, 1
    %p128 = por %p126, %p127
    %p129 = scmp.ne.s32.totalorder %s118, %s119
    %p130 = scmp.eq.s32.totalorder %s16, 0
    %p131 = por %p129, %p130
    %p132 = scmp.ne.s32.totalorder %s118, %s119
    %p133 = scmp.eq.s32.totalorder %s17, 1
    %p134 = por %p132, %p133
    %p136 = scmp.ne.s32.totalorder %s119, %s135
    %p137 = scmp.eq.s32.totalorder %s17, 0
    %p138 = por %p136, %p137
    %s139 = ssub.s32 %s18, %s30
    %p140 = scmp.eq.s32.totalorder %s139, 0
    %s142 = sadd.s32 %s141, 1
    %s143 = scalar_select %p140, %s141, %s142
    %p146 = pneg %p140
    %p147 = scmp.eq.s32.totalorder %s11, 1
    %p148 = por %p146, %p147
    %p149 = scmp.ne.s32.totalorder %s141, %s144
    %p150 = scmp.eq.s32.totalorder %s11, 0
    %p151 = por %p149, %p150
    %p152 = scmp.ne.s32.totalorder %s141, %s144
    %p153 = scmp.eq.s32.totalorder %s16, 1
    %p154 = por %p152, %p153
    %p155 = scmp.ne.s32.totalorder %s144, %s145
    %p156 = scmp.eq.s32.totalorder %s16, 0
    %p157 = por %p155, %p156
    %p158 = scmp.ne.s32.totalorder %s144, %s145
    %p159 = scmp.eq.s32.totalorder %s17, 1
    %p160 = por %p158, %p159
    %p162 = scmp.ne.s32.totalorder %s145, %s161
    %p163 = scmp.eq.s32.totalorder %s17, 0
    %p164 = por %p162, %p163
    %p165 = scmp.le.s32.totalorder 1, %s11
    %p166 = scmp.lt.s32.totalorder %s11, 3
    %p167 = pnand %p165, %p166
    %p168 = pneg %p167
    // Predicated region
    $region9: #{symetric_paf_loss.1} parent=5 // pred_check
      _
    $region10: #{symetric_paf_loss.1} parent=5 // pred_check_branch
      %170 = sbr.rel (%p167) target = $region12
    $region11: #{symetric_paf_loss.1} parent=5 // pred_region
      %s171 = ssub.s32 %s11, 1
    $region12: #{symetric_paf_loss.1} parent=5 // pred_fallthru
      _
    %p172 = scmp.lt.s32.totalorder %s11, 2
    // Predicated region
    $region13: #{symetric_paf_loss.1} parent=5 // pred_check
      %p173 = pneg %p172
    $region14: #{symetric_paf_loss.1} parent=5 // pred_check_branch
      %175 = sbr.rel (%p173) target = $region16
    $region15: #{symetric_paf_loss.1} parent=5 // pred_region
      // Predicated region
      $region17: #{symetric_paf_loss.1} parent=15 // pred_check
        %p176 = pneg %p45
      $region18: #{symetric_paf_loss.1} parent=15 // pred_check_branch
        %178 = sbr.rel (%p176) target = $region20
      $region19: #{symetric_paf_loss.1} parent=15 // pred_region
        %p179 = scmp.lt.s32.totalorder %s18, 1
        %s180 = scalar_select %p179, %s18, 1
        %p181 = scmp.lt.s32.totalorder %s19, 0
        %s182 = scalar_select %p181, %s19, 0
        %s183 = smul.addr %s180, 4
        %s184 = sadd.s32 %s182, %s183
        %s185 = smul.addr %s184, 2
        %s186 = scalar_lea.vmem %s0, %s185
      $region20: #{symetric_paf_loss.1} parent=15 // pred_fallthru
        _
      // Predicated region
      $region21: #{symetric_paf_loss.1} parent=15 // pred_check
        %p187 = pneg %p73
      $region22: #{symetric_paf_loss.1} parent=15 // pred_check_branch
        %189 = sbr.rel (%p187) target = $region24
      $region23: #{symetric_paf_loss.1} parent=15 // pred_region
        %p190 = scmp.lt.s32.totalorder %s18, 1
        %s191 = scalar_select %p190, %s18, 1
        %p192 = scmp.lt.s32.totalorder %s19, 0
        %s193 = scalar_select %p192, %s19, 0
        %s194 = smul.addr %s191, 4
        %s195 = sadd.s32 %s193, %s194
        %s196 = smul.addr %s195, 2
        %s197 = scalar_lea.vmem %s1, %s196
      $region24: #{symetric_paf_loss.1} parent=15 // pred_fallthru
        _
    $region16: #{symetric_paf_loss.1} parent=5 // pred_fallthru
      _
    %p198 = scmp.le.s32.totalorder 1, %s11
    %p199 = scmp.lt.s32.totalorder %s11, 3
    %p200 = pnand %p198, %p199
    %p201 = pneg %p200
    // Predicated region
    $region25: #{symetric_paf_loss.1} parent=5 // pred_check
      _
    $region26: #{symetric_paf_loss.1} parent=5 // pred_check_branch
      %203 = sbr.rel (%p200) target = $region28
    $region27: #{symetric_paf_loss.1} parent=5 // pred_region
      %s204 = ssub.s32 %s11, 1
      %p205 = scmp.lt.s32.totalorder %s20, 1
      %s206 = scalar_select %p205, %s20, 1
      %p207 = scmp.lt.s32.totalorder %s21, 0
      %s208 = scalar_select %p207, %s21, 0
      %s209 = smul.addr %s206, 4
      %s210 = sadd.s32 %s208, %s209
      %s211 = smul.addr %s210, 2
      %s212 = scalar_lea.vmem %s0, %s211
      %p213 = pneg %p51
      %p214 = pneg %p48
      %p215 = scmp.lt.s32.totalorder %s20, 1
      %s216 = scalar_select %p215, %s20, 1
      %p217 = scmp.lt.s32.totalorder %s21, 0
      %s218 = scalar_select %p217, %s21, 0
      %s219 = smul.addr %s216, 4
      %s220 = sadd.s32 %s218, %s219
      %s221 = smul.addr %s220, 2
      %s222 = scalar_lea.vmem %s1, %s221
      %p223 = pneg %p79
      %p224 = pneg %p76
      %p225 = pneg %p105
      %p226 = pneg %p102
      %p227 = scmp.lt.s32.totalorder %s20, 1
      %s228 = scalar_select %p227, %s20, 1
      %s229 = smul.addr %s228, 4
      %s230 = scalar_lea.vmem %s2, %s229
      %p231 = pneg %p131
      %p232 = pneg %p128
      %p233 = scmp.lt.s32.totalorder %s20, 1
      %s234 = scalar_select %p233, %s20, 1
      %s235 = smul.addr %s234, 4
      %s236 = scalar_lea.vmem %s3, %s235
      %p237 = pneg %p157
      %p238 = pneg %p154
      %p239 = scmp.lt.s32.totalorder %s20, 1
      %s240 = scalar_select %p239, %s20, 1
      %s241 = smul.addr %s240, 4
      %s242 = scalar_lea.vmem %s4, %s241
      %p243 = scmp.lt.s32.totalorder %s20, 1
      %s244 = scalar_select %p243, %s20, 1
      %p245 = scmp.lt.s32.totalorder %s21, 0
      %s246 = scalar_select %p245, %s21, 0
      %s247 = smul.addr %s244, 4
      %s248 = sadd.s32 %s246, %s247
      %s249 = smul.addr %s248, 2
      %s250 = scalar_lea.vmem %s0, %s249
      %p251 = scmp.lt.s32.totalorder %s20, 1
      %s252 = scalar_select %p251, %s20, 1
      %p253 = scmp.lt.s32.totalorder %s21, 0
      %s254 = scalar_select %p253, %s21, 0
      %s255 = smul.addr %s252, 4
      %s256 = sadd.s32 %s254, %s255
      %s257 = smul.addr %s256, 2
      %s258 = scalar_lea.vmem %s1, %s257
      %p259 = scmp.lt.s32.totalorder %s20, 1
      %s260 = scalar_select %p259, %s20, 1
      %s261 = smul.addr %s260, 4
      %s262 = scalar_lea.vmem %s2, %s261
      %p263 = scmp.lt.s32.totalorder %s20, 1
      %s264 = scalar_select %p263, %s20, 1
      %s265 = smul.addr %s264, 4
      %s266 = scalar_lea.vmem %s3, %s265
      %p267 = scmp.lt.s32.totalorder %s20, 1
      %s268 = scalar_select %p267, %s20, 1
      %s269 = smul.addr %s268, 4
      %s270 = scalar_lea.vmem %s4, %s269
      %p271 = scmp.eq.s32.totalorder %s21, 0
      // Predicated region
      $region29: #{symetric_paf_loss.1} parent=27 // pred_check
        %p272 = pneg %p271
      $region30: #{symetric_paf_loss.1} parent=27 // pred_check_branch
        %274 = sbr.rel (%p272) target = $region32
      $region31: #{symetric_paf_loss.1} parent=27 // pred_region
        %275 = vst [vmem:[%s262] sm:$0xf] 0.0
        %276 = vst [vmem:[%s266] sm:$0xf] 0.0
        %277 = vst [vmem:[%s270] sm:$0xf] 0.0
      $region32: #{symetric_paf_loss.1} parent=27 // pred_fallthru
        _
      %v278 = vld [vmem:[%s250] sm:$0x3]
      %v279 = vld [vmem:[%s258] sm:$0x3]
      %s280 = scalar_lea.vmem %s250, 6
      %v281 = vld [vmem:[%s280] sm:$0x3]
      %s282 = scalar_lea.vmem %s258, 6
      %v283 = vld [vmem:[%s282] sm:$0x3]
      %v284 = vsub.f32 %v278, %v279
      %v285 = vmul.f32 %v284, %v284
      %v286 = vadd.f32 %v281, %v279
      %v287 = vmul.f32 %v286, %v286
      %v288 = vmin.f32 %v285, %v287
      %v289 = vld [vmem:[%s262] sm:$0x1]
      %vm290 = vcmask 1041408
      %v291 = vsel %vm290, %v288, 0.0
      %v292 = vrot.slane %v291, 4
      %v293 = vadd.f32 %v291, %v292
      %v294 = vrot.slane %v293, 2
      %v295 = vadd.f32 %v293, %v294
      %v296 = vrot.slane %v295, 1
      %v297 = vadd.f32 %v295, %v296
      %v298 = vadd.f32 %v289, %v297
      %299 = vst [vmem:[%s262] sm:$0x1] %v298
      %v300 = vld [vmem:[%s266] sm:$0x1]
      %v301 = vsel %vm290, %v285, 0.0
      %v302 = vrot.slane %v301, 4
      %v303 = vadd.f32 %v301, %v302
      %v304 = vrot.slane %v303, 2
      %v305 = vadd.f32 %v303, %v304
      %v306 = vrot.slane %v305, 1
      %v307 = vadd.f32 %v305, %v306
      %v308 = vadd.f32 %v300, %v307
      %309 = vst [vmem:[%s266] sm:$0x1] %v308
      %v310 = vld [vmem:[%s270] sm:$0x1]
      %v311 = vand.u32 2147483647, %v279
      %v312 = vsel %vm290, %v311, -inf
      %v313 = vrot.slane %v312, 4
      %v314 = vmax.f32 %v312, %v313
      %v315 = vrot.slane %v314, 2
      %v316 = vmax.f32 %v314, %v315
      %v317 = vrot.slane %v316, 1
      %v318 = vmax.f32 %v316, %v317
      %v319 = vmax.f32 %v310, %v318
      %320 = vst [vmem:[%s270] sm:$0x1] %v319
      %v321 = vsub.f32 %v281, %v283
      %v322 = vmul.f32 %v321, %v321
      %v323 = vadd.f32 %v278, %v283
      %v324 = vmul.f32 %v323, %v323
      %v325 = vmin.f32 %v322, %v324
      %v326 = vld [vmem:[%s262 + $0x3] sm:$0x1]
      %v327 = vsel %vm290, %v325, 0.0
      %v328 = vrot.slane %v327, 4
      %v329 = vadd.f32 %v327, %v328
      %v330 = vrot.slane %v329, 2
      %v331 = vadd.f32 %v329, %v330
      %v332 = vrot.slane %v331, 1
      %v333 = vadd.f32 %v331, %v332
      %v334 = vadd.f32 %v326, %v333
      %335 = vst [vmem:[%s262 + $0x3] sm:$0x1] %v334
      %v336 = vld [vmem:[%s266 + $0x3] sm:$0x1]
      %v337 = vsel %vm290, %v322, 0.0
      %v338 = vrot.slane %v337, 4
      %v339 = vadd.f32 %v337, %v338
      %v340 = vrot.slane %v339, 2
      %v341 = vadd.f32 %v339, %v340
      %v342 = vrot.slane %v341, 1
      %v343 = vadd.f32 %v341, %v342
      %v344 = vadd.f32 %v336, %v343
      %345 = vst [vmem:[%s266 + $0x3] sm:$0x1] %v344
      %v346 = vld [vmem:[%s270 + $0x3] sm:$0x1]
      %v347 = vand.u32 2147483647, %v283
      %v348 = vsel %vm290, %v347, -inf
      %v349 = vrot.slane %v348, 4
      %v350 = vmax.f32 %v348, %v349
      %v351 = vrot.slane %v350, 2
      %v352 = vmax.f32 %v350, %v351
      %v353 = vrot.slane %v352, 1
      %v354 = vmax.f32 %v352, %v353
      %v355 = vmax.f32 %v346, %v354
      %356 = vst [vmem:[%s270 + $0x3] sm:$0x1] %v355
      %s357 = scalar_lea.vmem %s250, 2
      %v358 = vld [vmem:[%s357] sm:$0x3]
      %s359 = scalar_lea.vmem %s258, 2
      %v360 = vld [vmem:[%s359] sm:$0x3]
      %s361 = scalar_lea.vmem %s250, 4
      %v362 = vld [vmem:[%s361] sm:$0x3]
      %s363 = scalar_lea.vmem %s258, 4
      %v364 = vld [vmem:[%s363] sm:$0x3]
      %v365 = vsub.f32 %v358, %v360
      %v366 = vmul.f32 %v365, %v365
      %v367 = vadd.f32 %v362, %v360
      %v368 = vmul.f32 %v367, %v367
      %v369 = vmin.f32 %v366, %v368
      %v370 = vld [vmem:[%s262 + $0x1] sm:$0x1]
      %v371 = vsel %vm290, %v369, 0.0
      %v372 = vrot.slane %v371, 4
      %v373 = vadd.f32 %v371, %v372
      %v374 = vrot.slane %v373, 2
      %v375 = vadd.f32 %v373, %v374
      %v376 = vrot.slane %v375, 1
      %v377 = vadd.f32 %v375, %v376
      %v378 = vadd.f32 %v370, %v377
      %379 = vst [vmem:[%s262 + $0x1] sm:$0x1] %v378
      %v380 = vld [vmem:[%s266 + $0x1] sm:$0x1]
      %v381 = vsel %vm290, %v366, 0.0
      %v382 = vrot.slane %v381, 4
      %v383 = vadd.f32 %v381, %v382
      %v384 = vrot.slane %v383, 2
      %v385 = vadd.f32 %v383, %v384
      %v386 = vrot.slane %v385, 1
      %v387 = vadd.f32 %v385, %v386
      %v388 = vadd.f32 %v380, %v387
      %389 = vst [vmem:[%s266 + $0x1] sm:$0x1] %v388
      %v390 = vld [vmem:[%s270 + $0x1] sm:$0x1]
      %v391 = vand.u32 2147483647, %v360
      %v392 = vsel %vm290, %v391, -inf
      %v393 = vrot.slane %v392, 4
      %v394 = vmax.f32 %v392, %v393
      %v395 = vrot.slane %v394, 2
      %v396 = vmax.f32 %v394, %v395
      %v397 = vrot.slane %v396, 1
      %v398 = vmax.f32 %v396, %v397
      %v399 = vmax.f32 %v390, %v398
      %400 = vst [vmem:[%s270 + $0x1] sm:$0x1] %v399
      %v401 = vsub.f32 %v362, %v364
      %v402 = vmul.f32 %v401, %v401
      %v403 = vadd.f32 %v358, %v364
      %v404 = vmul.f32 %v403, %v403
      %v405 = vmin.f32 %v402, %v404
      %v406 = vld [vmem:[%s262 + $0x2] sm:$0x1]
      %v407 = vsel %vm290, %v405, 0.0
      %v408 = vrot.slane %v407, 4
      %v409 = vadd.f32 %v407, %v408
      %v410 = vrot.slane %v409, 2
      %v411 = vadd.f32 %v409, %v410
      %v412 = vrot.slane %v411, 1
      %v413 = vadd.f32 %v411, %v412
      %v414 = vadd.f32 %v406, %v413
      %415 = vst [vmem:[%s262 + $0x2] sm:$0x1] %v414
      %v416 = vld [vmem:[%s266 + $0x2] sm:$0x1]
      %v417 = vsel %vm290, %v402, 0.0
      %v418 = vrot.slane %v417, 4
      %v419 = vadd.f32 %v417, %v418
      %v420 = vrot.slane %v419, 2
      %v421 = vadd.f32 %v419, %v420
      %v422 = vrot.slane %v421, 1
      %v423 = vadd.f32 %v421, %v422
      %v424 = vadd.f32 %v416, %v423
      %425 = vst [vmem:[%s266 + $0x2] sm:$0x1] %v424
      %v426 = vld [vmem:[%s270 + $0x2] sm:$0x1]
      %v427 = vand.u32 2147483647, %v364
      %v428 = vsel %vm290, %v427, -inf
      %v429 = vrot.slane %v428, 4
      %v430 = vmax.f32 %v428, %v429
      %v431 = vrot.slane %v430, 2
      %v432 = vmax.f32 %v430, %v431
      %v433 = vrot.slane %v432, 1
      %v434 = vmax.f32 %v432, %v433
      %v435 = vmax.f32 %v426, %v434
      %436 = vst [vmem:[%s270 + $0x2] sm:$0x1] %v435
      %p437 = scmp.lt.s32.totalorder %s20, 1
      %s438 = scalar_select %p437, %s20, 1
      %s439 = smul.addr %s438, 4
      %s440 = scalar_lea.vmem %s2, %s439
      %p441 = scmp.lt.s32.totalorder %s20, 1
      %s442 = scalar_select %p441, %s20, 1
      %s443 = smul.addr %s442, 4
      %s444 = scalar_lea.vmem %s3, %s443
      %p445 = scmp.lt.s32.totalorder %s20, 1
      %s446 = scalar_select %p445, %s20, 1
      %s447 = smul.addr %s446, 4
      %s448 = scalar_lea.vmem %s4, %s447
      // Predicated region
      $region33: #{symetric_paf_loss.1} parent=27 // pred_check
        %p449 = pneg %p102
      $region34: #{symetric_paf_loss.1} parent=27 // pred_check_branch
        %451 = sbr.rel (%p449) target = $region36
      $region35: #{symetric_paf_loss.1} parent=27 // pred_region
        _
      $region36: #{symetric_paf_loss.1} parent=27 // pred_fallthru
        _
      // Predicated region
      $region37: #{symetric_paf_loss.1} parent=27 // pred_check
        %p452 = pneg %p128
      $region38: #{symetric_paf_loss.1} parent=27 // pred_check_branch
        %454 = sbr.rel (%p452) target = $region40
      $region39: #{symetric_paf_loss.1} parent=27 // pred_region
        _
      $region40: #{symetric_paf_loss.1} parent=27 // pred_fallthru
        _
      // Predicated region
      $region41: #{symetric_paf_loss.1} parent=27 // pred_check
        %p455 = pneg %p154
      $region42: #{symetric_paf_loss.1} parent=27 // pred_check_branch
        %457 = sbr.rel (%p455) target = $region44
      $region43: #{symetric_paf_loss.1} parent=27 // pred_region
        _
      $region44: #{symetric_paf_loss.1} parent=27 // pred_fallthru
        _
    $region28: #{symetric_paf_loss.1} parent=5 // pred_fallthru
      _
    %p458 = scmp.le.s32.totalorder 2, %s11
    // Predicated region
    $region45: #{symetric_paf_loss.1} parent=5 // pred_check
      %p459 = pneg %p458
    $region46: #{symetric_paf_loss.1} parent=5 // pred_check_branch
      %461 = sbr.rel (%p459) target = $region48
    $region47: #{symetric_paf_loss.1} parent=5 // pred_region
      %s462 = ssub.s32 %s11, 2
      // Predicated region
      $region49: #{symetric_paf_loss.1} parent=47 // pred_check
        %p463 = pneg %p108
      $region50: #{symetric_paf_loss.1} parent=47 // pred_check_branch
        %465 = sbr.rel (%p463) target = $region52
      $region51: #{symetric_paf_loss.1} parent=47 // pred_region
        %p466 = scmp.lt.s32.totalorder %s22, 1
        %s467 = scalar_select %p466, %s22, 1
        %s468 = smul.addr %s467, 4
        %s469 = scalar_lea.vmem %s2, %s468
      $region52: #{symetric_paf_loss.1} parent=47 // pred_fallthru
        _
      // Predicated region
      $region53: #{symetric_paf_loss.1} parent=47 // pred_check
        %p470 = pneg %p134
      $region54: #{symetric_paf_loss.1} parent=47 // pred_check_branch
        %472 = sbr.rel (%p470) target = $region56
      $region55: #{symetric_paf_loss.1} parent=47 // pred_region
        %p473 = scmp.lt.s32.totalorder %s22, 1
        %s474 = scalar_select %p473, %s22, 1
        %s475 = smul.addr %s474, 4
        %s476 = scalar_lea.vmem %s3, %s475
      $region56: #{symetric_paf_loss.1} parent=47 // pred_fallthru
        _
      // Predicated region
      $region57: #{symetric_paf_loss.1} parent=47 // pred_check
        %p477 = pneg %p160
      $region58: #{symetric_paf_loss.1} parent=47 // pred_check_branch
        %479 = sbr.rel (%p477) target = $region60
      $region59: #{symetric_paf_loss.1} parent=47 // pred_region
        %p480 = scmp.lt.s32.totalorder %s22, 1
        %s481 = scalar_select %p480, %s22, 1
        %s482 = smul.addr %s481, 4
        %s483 = scalar_lea.vmem %s4, %s482
      $region60: #{symetric_paf_loss.1} parent=47 // pred_fallthru
        _
    $region48: #{symetric_paf_loss.1} parent=5 // pred_fallthru
      _
  $region6: #{symetric_paf_loss.1} parent=0 // loop_footer
    %s15 = sadd.s32 1, %s11
  $region7: #{symetric_paf_loss.1} parent=0 // loop_footer_branch
    %10 = sbr.rel target = $region3
  $region8: #{symetric_paf_loss.1} parent=0 // loop_exit
    _

</llo_original>
